<compile_context>
chip_gen: v7x
topology: tpu7x:2x2x1
jax: 0.10.0
libtpu: 0.0.40
codegen_flags: <defaults>
</compile_context>

<pallas_src>
import functools

import jax
import jax.numpy as jnp
from jax.experimental import pallas as pl
from jax.experimental.pallas import tpu as pltpu


# ------------------------------ Pallas kernel -------------------------------

def fused_dir_gcn_kernel(adj_v_ref, adj_h_ref, x_ref, w1_ref, b1_ref,
                         w2a_ref, w2b_ref, b2_ref, out_ref, *, n):
    """conv(F->H) -> ReLU -> conv(H->C) -> log_softmax, all VMEM-resident."""
    # ---------- layer 1: DirSymReGCNConv(F -> H) + ReLU ----------
    # One MXU matmul computes both directed aggregations: [A_n @ x ; At_n @ x].
    agg = jnp.dot(adj_v_ref[...], x_ref[...],
                  preferred_element_type=jnp.float32)                  # (2N, Fp) f32
    # K-concat of the two branches (alpha already folded into w1): a single
    # (N, 2Fp) @ (2Fp, H) matmul replaces two matmuls + blend.  Fp is a
    # multiple of 128, so the lane concat is tile-aligned.
    cat = jnp.concatenate([agg[:n, :], agg[n:, :]], axis=1)            # (N, 2Fp)
    h = jnp.dot(cat.astype(jnp.bfloat16), w1_ref[...],
                preferred_element_type=jnp.float32) + b1_ref[...]      # (N, H) f32
    h_bf = jnp.maximum(h, 0.0).astype(jnp.bfloat16)

    # ---------- layer 2: DirSymReGCNConv(H -> C) ----------
    # W-first ordering (C < H): the N^2-sized aggregation contracts over C=8
    # instead of H=32 (4x fewer MXU flops in the dominant term at scale).
    hw = jnp.concatenate(
        [jnp.dot(h_bf, w2a_ref[...], preferred_element_type=jnp.float32),
         jnp.dot(h_bf, w2b_ref[...], preferred_element_type=jnp.float32)],
        axis=0).astype(jnp.bfloat16)                                   # (2N, C)
    # [A_n | At_n] @ [h@W2a' ; h@W2b'] does both directed branches in one matmul.
    y = jnp.dot(adj_h_ref[...], hw,
                preferred_element_type=jnp.float32) + b2_ref[...]      # (N, C) f32

    # ---------- fused log_softmax tail (transcendentals ride the EUP slot) --
    m = jnp.max(y, axis=1, keepdims=True)
    s = y - m
    lse = jnp.log(jnp.sum(jnp.exp(s), axis=1, keepdims=True))
    out_ref[...] = (s - lse).astype(out_ref.dtype)


# ------------------------- graph preprocessing (glue) -----------------------

def renorm_adj(edge_index, num_nodes):
    """Dense re-normalized adjacencies for A and A^T (one-time preprocessing).

    # TODO(synk): get_norm_adj(..., norm='re-norm') is not shown in the spec;
    # implemented as the GCN renormalization trick D~^{-1/2}(A+I)D~^{-1/2},
    # D~ = rowsum(A+I), applied independently to A and A^T.
    """
    row, col = edge_index[0], edge_index[1]
    # .add (not .set): duplicate edges accumulate multiplicity, matching
    # scatter-add / coalesced sparse semantics (review correctness concern).
    a = jnp.zeros((num_nodes, num_nodes), jnp.float32).at[row, col].add(1.0)

    def re_norm(m):
        m = m + jnp.eye(num_nodes, dtype=m.dtype)
        deg = m.sum(axis=1)
        d_inv_sqrt = jnp.where(deg > 0, jax.lax.rsqrt(deg), 0.0)
        return d_inv_sqrt[:, None] * m * d_inv_sqrt[None, :]

    return re_norm(a), re_norm(a.T)


def _round_up(v, m):
    return (v + m - 1) // m * m


def prepare_operands(x, adj_n, adjt_n, params, alpha):
    """One-time glue: alpha folding, branch stacking, lane padding, bf16 casts."""
    (w1a, b1a, w1b, b1b), (w2a, b2a, w2b, b2b) = params
    n, f = x.shape
    h = w1a.shape[1]
    bf16 = jnp.bfloat16

    # Stacked adjacencies: one MXU matmul per layer covers both directed branches.
    adj_v = jnp.concatenate([adj_n, adjt_n], axis=0).astype(bf16)        # (2N, N)
    adj_h = jnp.concatenate([adj_n, adjt_n], axis=1).astype(bf16)        # (N, 2N)

    # Lane-dense feature padding: makes the in-kernel K-concat of the two
    # branches 128-lane aligned (zero rows of w1 keep the math exact).
    fp = _round_up(f, 128)
    x_pad = jnp.zeros((n, fp), jnp.float32).at[:, :f].set(x).astype(bf16)

    # alpha folded into weights / biases (removes per-tile scales + adds).
    w1 = (jnp.zeros((2 * fp, h), jnp.float32)
          .at[:f].set(alpha * w1a)
          .at[fp:fp + f].set((1.0 - alpha) * w1b)).astype(bf16)          # (2Fp, H)
    b1 = (alpha * b1a + (1.0 - alpha) * b1b).reshape(1, -1).astype(jnp.float32)
    w2a_f = (alpha * w2a).astype(bf16)
    w2b_f = ((1.0 - alpha) * w2b).astype(bf16)
    b2 = (alpha * b2a + (1.0 - alpha) * b2b).reshape(1, -1).astype(jnp.float32)
    return adj_v, adj_h, x_pad, w1, b1, w2a_f, w2b_f, b2


# --------------------------------- wrapper -----------------------------------

def gnn_forward(x, edge_index, params, alpha):
    n = x.shape[0]
    c = params[1][0].shape[1]
    adj_n, adjt_n = renorm_adj(edge_index, n)
    operands = prepare_operands(x, adj_n, adjt_n, params, alpha)

    vmem = pl.BlockSpec(memory_space=pltpu.MemorySpace.VMEM)
    return pl.pallas_call(
        functools.partial(fused_dir_gcn_kernel, n=n),
        out_shape=jax.ShapeDtypeStruct((n, c), jnp.float32),
        in_specs=[vmem] * len(operands),
        out_specs=vmem,
    )(*operands)


# ------------------------------- references ----------------------------------

def gnn_forward_ref_f32(x, edge_index, params, alpha):
    """Pure-JAX f32 reference with the original module's op ordering."""
    adj_n, adjt_n = renorm_adj(edge_index, x.shape[0])
    (w1a, b1a, w1b, b1b), (w2a, b2a, w2b, b2b) = params

    def conv(z, wa, ba, wb, bb):
        return (alpha * ((adj_n @ z) @ wa + ba)
                + (1.0 - alpha) * ((adjt_n @ z) @ wb + bb))

    h = jnp.maximum(conv(x, w1a, b1a, w1b, b1b), 0.0)
    y = conv(h, w2a, b2a, w2b, b2b)
    return jax.nn.log_softmax(y, axis=1)


def gnn_forward_ref_bf16(x, edge_index, params, alpha):
    """Pure-JAX reference mirroring the kernel's exact bf16/f32 numerics."""
    n = x.shape[0]
    adj_n, adjt_n = renorm_adj(edge_index, n)
    adj_v, adj_h, x_pad, w1, b1, w2a_f, w2b_f, b2 = prepare_operands(
        x, adj_n, adjt_n, params, alpha)
    agg = jnp.dot(adj_v, x_pad, preferred_element_type=jnp.float32)
    cat = jnp.concatenate([agg[:n], agg[n:]], axis=1).astype(jnp.bfloat16)
    h = jnp.maximum(jnp.dot(cat, w1, preferred_element_type=jnp.float32) + b1, 0.0)
    h_bf = h.astype(jnp.bfloat16)
    hw = jnp.concatenate(
        [jnp.dot(h_bf, w2a_f, preferred_element_type=jnp.float32),
         jnp.dot(h_bf, w2b_f, preferred_element_type=jnp.float32)],
        axis=0).astype(jnp.bfloat16)
    y = jnp.dot(adj_h, hw, preferred_element_type=jnp.float32) + b2
    return jax.nn.log_softmax(y, axis=1)


# ------------------------------ parameters -----------------------------------

def init_linear(key, in_dim, out_dim):
    """PyTorch nn.Linear default init; weight stored as (in_dim, out_dim)."""
    kw, kb = jax.random.split(key)
    bound = 1.0 / jnp.sqrt(in_dim)
    w = jax.random.uniform(kw, (in_dim, out_dim), jnp.float32, -bound, bound)
    b = jax.random.uniform(kb, (out_dim,), jnp.float32, -bound, bound)
    return w, b


# --------------------------------- main ---------------------------------------

if __name__ == "__main__":
    num_nodes, num_features, hidden_dim, num_classes = 32, 16, 32, 8
    num_edges = 64
    alpha = 0.5  # nn.Parameter(ones(1) * 0.5), not learned

    key = jax.random.PRNGKey(0)
    kx, ke1, ke2, k1, k2, k3, k4 = jax.random.split(key, 7)

    x = jax.random.normal(kx, (num_nodes, num_features), jnp.float32)
    edge_index = jnp.stack([
        jax.random.randint(ke1, (num_edges,), 0, num_nodes, jnp.int32),
        jax.random.randint(ke2, (num_edges,), 0, num_nodes, jnp.int32),
    ])

    # layer 0: DirSymReGCNConv(F -> H); layer 1: DirSymReGCNConv(H -> C)
    w1a, b1a = init_linear(k1, num_features, hidden_dim)
    w1b, b1b = init_linear(k2, num_features, hidden_dim)
    w2a, b2a = init_linear(k3, hidden_dim, num_classes)
    w2b, b2b = init_linear(k4, hidden_dim, num_classes)
    params = ((w1a, b1a, w1b, b1b), (w2a, b2a, w2b, b2b))

    out = jax.block_until_ready(gnn_forward(x, edge_index, params, alpha))
    assert out.shape == (num_nodes, num_classes)

    # Tight check: kernel vs a JAX reference using identical bf16/f32 numerics.
    ref_bf16 = jax.block_until_ready(gnn_forward_ref_bf16(x, edge_index, params, alpha))
    if not jnp.allclose(out, ref_bf16, atol=1e-2, rtol=1e-2):
        raise AssertionError("Pallas output mismatch vs bf16-matched JAX reference")

    # Relaxed check vs full-f32 module semantics (documents the deliberate
    # bf16-for-MXU precision tradeoff flagged in the review).
    ref_f32 = jax.block_until_ready(gnn_forward_ref_f32(x, edge_index, params, alpha))
    if not jnp.allclose(out, ref_f32, atol=1e-1, rtol=1e-1):
        raise AssertionError("Pallas output mismatch vs f32 JAX reference")

    print("KERNEL_OK")
</pallas_src>

<mosaic_0001>
module attributes {stable_mosaic.version = 11 : i64} {
  func.func @fused_dir_gcn_kernel(%arg0: memref<64x32xbf16, #tpu.memory_space<vmem>>, %arg1: memref<32x64xbf16, #tpu.memory_space<vmem>>, %arg2: memref<32x128xbf16, #tpu.memory_space<vmem>>, %arg3: memref<256x32xbf16, #tpu.memory_space<vmem>>, %arg4: memref<1x32xf32, #tpu.memory_space<vmem>>, %arg5: memref<32x8xbf16, #tpu.memory_space<vmem>>, %arg6: memref<32x8xbf16, #tpu.memory_space<vmem>>, %arg7: memref<1x8xf32, #tpu.memory_space<vmem>>, %arg8: memref<32x8xf32, #tpu.memory_space<vmem>>) attributes {dimension_semantics = [], scalar_prefetch = 0 : i64, scratch_operands = 0 : i64, tpu.core_type = #tpu.core_type<tc>} {
    %c0 = arith.constant 0 : index
    %c0_0 = arith.constant 0 : index
    %0 = vector.load %arg0[%c0, %c0_0] : memref<64x32xbf16, #tpu.memory_space<vmem>>, vector<64x32xbf16>
    %c0_1 = arith.constant 0 : index
    %c0_2 = arith.constant 0 : index
    %1 = vector.load %arg2[%c0_1, %c0_2] : memref<32x128xbf16, #tpu.memory_space<vmem>>, vector<32x128xbf16>
    %cst = arith.constant dense<0.000000e+00> : vector<64x128xf32>
    %2 = tpu.matmul %0, %1, %cst {dimension_numbers = #tpu.dot_dimension_numbers<[1], [0], [0], [1], [0, 0, 1, 1], [], []>} : vector<64x32xbf16>, vector<32x128xbf16>, vector<64x128xf32> -> vector<64x128xf32>
    %3 = vector.extract_strided_slice %2 {offsets = [0, 0], sizes = [32, 128], strides = [1, 1]} : vector<64x128xf32> to vector<32x128xf32>
    %4 = vector.extract_strided_slice %2 {offsets = [32, 0], sizes = [32, 128], strides = [1, 1]} : vector<64x128xf32> to vector<32x128xf32>
    %5 = tpu.concatenate %3, %4 in 1 : vector<32x128xf32>, vector<32x128xf32> -> vector<32x256xf32>
    %6 = arith.truncf %5 : vector<32x256xf32> to vector<32x256xbf16>
    %c0_3 = arith.constant 0 : index
    %c0_4 = arith.constant 0 : index
    %7 = vector.load %arg3[%c0_3, %c0_4] : memref<256x32xbf16, #tpu.memory_space<vmem>>, vector<256x32xbf16>
    %cst_5 = arith.constant dense<0.000000e+00> : vector<32x32xf32>
    %8 = tpu.matmul %6, %7, %cst_5 {dimension_numbers = #tpu.dot_dimension_numbers<[1], [0], [0], [1], [0, 0, 1, 1], [], []>} : vector<32x256xbf16>, vector<256x32xbf16>, vector<32x32xf32> -> vector<32x32xf32>
    %c0_6 = arith.constant 0 : index
    %c0_7 = arith.constant 0 : index
    %9 = vector.load %arg4[%c0_6, %c0_7] : memref<1x32xf32, #tpu.memory_space<vmem>>, vector<1x32xf32>
    %10 = vector.broadcast %9 : vector<1x32xf32> to vector<32x32xf32>
    %11 = arith.addf %8, %10 : vector<32x32xf32>
    %cst_8 = arith.constant 0.000000e+00 : f32
    %12 = vector.broadcast %cst_8 : f32 to vector<32x32xf32>
    %13 = arith.maximumf %11, %12 : vector<32x32xf32>
    %14 = arith.truncf %13 : vector<32x32xf32> to vector<32x32xbf16>
    %c0_9 = arith.constant 0 : index
    %c0_10 = arith.constant 0 : index
    %15 = vector.load %arg5[%c0_9, %c0_10] : memref<32x8xbf16, #tpu.memory_space<vmem>>, vector<32x8xbf16>
    %cst_11 = arith.constant dense<0.000000e+00> : vector<32x8xf32>
    %16 = tpu.matmul %14, %15, %cst_11 {dimension_numbers = #tpu.dot_dimension_numbers<[1], [0], [0], [1], [0, 0, 1, 1], [], []>} : vector<32x32xbf16>, vector<32x8xbf16>, vector<32x8xf32> -> vector<32x8xf32>
    %c0_12 = arith.constant 0 : index
    %c0_13 = arith.constant 0 : index
    %17 = vector.load %arg6[%c0_12, %c0_13] : memref<32x8xbf16, #tpu.memory_space<vmem>>, vector<32x8xbf16>
    %cst_14 = arith.constant dense<0.000000e+00> : vector<32x8xf32>
    %18 = tpu.matmul %14, %17, %cst_14 {dimension_numbers = #tpu.dot_dimension_numbers<[1], [0], [0], [1], [0, 0, 1, 1], [], []>} : vector<32x32xbf16>, vector<32x8xbf16>, vector<32x8xf32> -> vector<32x8xf32>
    %19 = tpu.concatenate %16, %18 in 0 : vector<32x8xf32>, vector<32x8xf32> -> vector<64x8xf32>
    %20 = arith.truncf %19 : vector<64x8xf32> to vector<64x8xbf16>
    %c0_15 = arith.constant 0 : index
    %c0_16 = arith.constant 0 : index
    %21 = vector.load %arg1[%c0_15, %c0_16] : memref<32x64xbf16, #tpu.memory_space<vmem>>, vector<32x64xbf16>
    %cst_17 = arith.constant dense<0.000000e+00> : vector<32x8xf32>
    %22 = tpu.matmul %21, %20, %cst_17 {dimension_numbers = #tpu.dot_dimension_numbers<[1], [0], [0], [1], [0, 0, 1, 1], [], []>} : vector<32x64xbf16>, vector<64x8xbf16>, vector<32x8xf32> -> vector<32x8xf32>
    %c0_18 = arith.constant 0 : index
    %c0_19 = arith.constant 0 : index
    %23 = vector.load %arg7[%c0_18, %c0_19] : memref<1x8xf32, #tpu.memory_space<vmem>>, vector<1x8xf32>
    %24 = vector.broadcast %23 : vector<1x8xf32> to vector<32x8xf32>
    %25 = arith.addf %22, %24 : vector<32x8xf32>
    %cst_20 = arith.constant dense<0xFF800000> : vector<32xf32>
    %26 = vector.multi_reduction <maximumf>, %25, %cst_20 [1] : vector<32x8xf32> to vector<32xf32>
    %27 = vector.shape_cast %26 : vector<32xf32> to vector<32x1xf32>
    %28 = vector.broadcast %27 : vector<32x1xf32> to vector<32x8xf32>
    %29 = arith.subf %25, %28 : vector<32x8xf32>
    %30 = math.exp %29 : vector<32x8xf32>
    %cst_21 = arith.constant dense<0.000000e+00> : vector<32xf32>
    %31 = vector.multi_reduction <add>, %30, %cst_21 [1] : vector<32x8xf32> to vector<32xf32>
    %32 = vector.shape_cast %31 : vector<32xf32> to vector<32x1xf32>
    %33 = math.log %32 : vector<32x1xf32>
    %34 = vector.broadcast %33 : vector<32x1xf32> to vector<32x8xf32>
    %35 = arith.subf %29, %34 : vector<32x8xf32>
    %c0_22 = arith.constant 0 : index
    %c0_23 = arith.constant 0 : index
    %36 = vector.load %arg8[%c0_22, %c0_23] : memref<32x8xf32, #tpu.memory_space<vmem>>, vector<32x8xf32>
    tpu.vector_store %arg8[%c0_22, %c0_23], %35 {strides = array<i32>} : memref<32x8xf32, #tpu.memory_space<vmem>>, vector<32x8xf32>,
    return
  }
}

</mosaic_0001>

<llo_original>
// kernel: tpu_custom_call.1
$region0: #{tpu_custom_call.1}
  #allocation0 [shape = 'u32[]', space=smem, size = 0x4, offset = 0x4, fixed_abs, tag = 'smem constant byte address 0x4 - core index']
  #allocation1 [shape = 'u32[144,128]{1,0:T(1,128)}', space=vmem, size = 0x12000, scoped, tag = 'internal scratch']
  %s0 = inlined_call_operand.vmem [shape: bf16[64,32], index: 0, kind: input, shape index: {}]
  %s1 = inlined_call_operand.vmem [shape: bf16[32,64], index: 1, kind: input, shape index: {}]
  %s2 = inlined_call_operand.vmem [shape: bf16[32,128], index: 2, kind: input, shape index: {}]
  %s3 = inlined_call_operand.vmem [shape: bf16[256,32], index: 3, kind: input, shape index: {}]
  %s4 = inlined_call_operand.vmem [shape: f32[1,32], index: 4, kind: input, shape index: {}]
  %s5 = inlined_call_operand.vmem [shape: bf16[32,8], index: 5, kind: input, shape index: {}]
  %s6 = inlined_call_operand.vmem [shape: bf16[32,8], index: 6, kind: input, shape index: {}]
  %s7 = inlined_call_operand.vmem [shape: f32[1,8], index: 7, kind: input, shape index: {}]
  %s8 = inlined_call_operand.vmem [shape: f32[32,8], index: 8, kind: output, shape index: {}]
  %s9 = sld [smem:[#allocation0]]
  $region42: #{tpu_custom_call.1} parent=0
    _
  %s11 = ssub.s32 1, %s9
  %s12 = scalar_select 0, %s11, %s9
  // Predicated region
  $region2: #{tpu_custom_call.1} parent=0 // pred_check
    _
  $region3: #{tpu_custom_call.1} parent=0 // pred_check_branch
    %14 = sbr.rel (0) target = $region5
  $region4: #{tpu_custom_call.1} parent=0 // pred_region
    _
  $region5: #{tpu_custom_call.1} parent=0 // pred_fallthru
    _
  // Predicated region
  $region6: #{tpu_custom_call.1} parent=0 // pred_check
    _
  $region7: #{tpu_custom_call.1} parent=0 // pred_check_branch
    %16 = sbr.rel (0) target = $region9
  $region8: #{tpu_custom_call.1} parent=0 // pred_region
    _
  $region9: #{tpu_custom_call.1} parent=0 // pred_fallthru
    _
  // Predicated region
  $region10: #{tpu_custom_call.1} parent=0 // pred_check
    _
  $region11: #{tpu_custom_call.1} parent=0 // pred_check_branch
    %18 = sbr.rel (0) target = $region13
  $region12: #{tpu_custom_call.1} parent=0 // pred_region
    _
  $region13: #{tpu_custom_call.1} parent=0 // pred_fallthru
    _
  // Predicated region
  $region14: #{tpu_custom_call.1} parent=0 // pred_check
    _
  $region15: #{tpu_custom_call.1} parent=0 // pred_check_branch
    %20 = sbr.rel (0) target = $region17
  $region16: #{tpu_custom_call.1} parent=0 // pred_region
    _
  $region17: #{tpu_custom_call.1} parent=0 // pred_fallthru
    _
  // Predicated region
  $region18: #{tpu_custom_call.1} parent=0 // pred_check
    _
  $region19: #{tpu_custom_call.1} parent=0 // pred_check_branch
    %22 = sbr.rel (0) target = $region21
  $region20: #{tpu_custom_call.1} parent=0 // pred_region
    _
  $region21: #{tpu_custom_call.1} parent=0 // pred_fallthru
    _
  // Predicated region
  $region22: #{tpu_custom_call.1} parent=0 // pred_check
    _
  $region23: #{tpu_custom_call.1} parent=0 // pred_check_branch
    %24 = sbr.rel (0) target = $region25
  $region24: #{tpu_custom_call.1} parent=0 // pred_region
    _
  $region25: #{tpu_custom_call.1} parent=0 // pred_fallthru
    _
  // Predicated region
  $region26: #{tpu_custom_call.1} parent=0 // pred_check
    _
  $region27: #{tpu_custom_call.1} parent=0 // pred_check_branch
    %26 = sbr.rel (0) target = $region29
  $region28: #{tpu_custom_call.1} parent=0 // pred_region
    _
  $region29: #{tpu_custom_call.1} parent=0 // pred_fallthru
    _
  // Predicated region
  $region30: #{tpu_custom_call.1} parent=0 // pred_check
    _
  $region31: #{tpu_custom_call.1} parent=0 // pred_check_branch
    %28 = sbr.rel (0) target = $region33
  $region32: #{tpu_custom_call.1} parent=0 // pred_region
    _
  $region33: #{tpu_custom_call.1} parent=0 // pred_fallthru
    _
  %v30 = vld [vmem:[%s0] sm:$0xf]
  %v31 = vld [vmem:[%s0 + $0x4] sm:$0xf]
  %v32 = vld [vmem:[%s0 + $0x8] sm:$0xf]
  %v33 = vld [vmem:[%s0 + $0xc] sm:$0xf]
  %v34 = vld [vmem:[%s0 + $0x10] sm:$0xf]
  %v35 = vld [vmem:[%s0 + $0x14] sm:$0xf]
  %v36 = vld [vmem:[%s0 + $0x18] sm:$0xf]
  %v37 = vld [vmem:[%s0 + $0x1c] sm:$0xf]
  %v38 = vld [vmem:[%s2] sm:$0xf]
  %v39 = vld [vmem:[%s2 + $0x4] sm:$0xf]
  %v40 = vld [vmem:[%s2 + $0x8] sm:$0xf]
  %v41 = vld [vmem:[%s2 + $0xc] sm:$0xf]
  %v50 = vunpack.c.l.b16 %v30
  %v51 = vunpack.c.l.b16 %v31
  %v52 = vunpack.c.l.b16 %v32
  %v53 = vunpack.c.l.b16 %v33
  %v54 = vunpack.c.l.b16 %v34
  %v55 = vunpack.c.l.b16 %v35
  %v56 = vunpack.c.l.b16 %v36
  %v57 = vunpack.c.l.b16 %v37
  %v58 = vpack.c.b16 %v51, %v50
  %v59 = vpack.c.b16 %v53, %v52
  %v60 = vpack.c.b16 %v55, %v54
  %v61 = vpack.c.b16 %v57, %v56
  %v66 = vunpack.c.l.b16 %v38
  %v67 = vunpack.c.l.b16 %v39
  %v68 = vunpack.c.l.b16 %v40
  %v69 = vunpack.c.l.b16 %v41
  %v70 = vpack.c.b16 %v67, %v66
  %v71 = vpack.c.b16 %v69, %v68
  %vm74 = vcmask 261120
  %v76 = vsel %vm74, %v58, 0
  %v79 = vsel %vm74, %v59, 0
  %v82 = vsel %vm74, %v60, 0
  %v85 = vsel %vm74, %v61, 0
  %87 = vmatprep.subr.bf16.mxu0 0
  %88 = vmatpush1.bf16.msra.mxu0 %v70
  %89 = vmatprep.subr.bf16.mxu0 0
  %90 = vmatpush1.bf16.msra.mxu0 %v71
  %91 = vmatprep.subr.bf16.mxu0 0
  %92 = vmatpush1.bf16.msra.mxu0 0
  %93 = vmatprep.subr.bf16.mxu0 0
  %94 = vmatpush1.bf16.msra.mxu0 0
  %95 = vmatprep.subr.bf16.mxu0 0
  %96 = vmatpush1.bf16.msra.mxu0 0
  %97 = vmatprep.subr.bf16.mxu0 0
  %98 = vmatpush1.bf16.msra.mxu0 0
  %99 = vmatprep.subr.bf16.mxu0 0
  %100 = vmatpush1.bf16.msra.mxu0 0
  %101 = vmatprep.subr.bf16.mxu0 0
  %102 = vmatpush1.bf16.msra.mxu0 0
  %103 = vmatprep.subr.bf16.mxu0 0
  %104 = vmatpush1.bf16.msra.mxu0 0
  %105 = vmatprep.subr.bf16.mxu0 0
  %106 = vmatpush1.bf16.msra.mxu0 0
  %107 = vmatprep.subr.bf16.mxu0 0
  %108 = vmatpush1.bf16.msra.mxu0 0
  %109 = vmatprep.subr.bf16.mxu0 0
  %110 = vmatpush1.bf16.msra.mxu0 0
  %111 = vmatprep.subr.bf16.mxu0 0
  %112 = vmatpush1.bf16.msra.mxu0 0
  %113 = vmatprep.subr.bf16.mxu0 0
  %114 = vmatpush1.bf16.msra.mxu0 0
  %115 = vmatprep.subr.bf16.mxu0 0
  %116 = vmatpush1.bf16.msra.mxu0 0
  %117 = vmatprep.subr.bf16.mxu0 0
  %118 = vmatpush1.bf16.msra.mxu0 0
  %119 = vmatprep.mubr.bf16.mxu0 0
  %120 = vmatmul.mubr.bf16.gmra.mrb[0].mxu0 %v76
  %v121 = vpop.f32.mrb[0].mxu0
  %v122 = vadd.f32 0.0, %v121
  %v123 = vpop.f32.mrb[0].mxu0
  %v124 = vpop.f32.mrb[0].mxu0
  %v125 = vadd.f32 0.0, %v124
  %v126 = vpop.f32.mrb[0].mxu0
  %127 = vmatprep.mubr.bf16.mxu0 0
  %128 = vmatmul.mubr.bf16.gmra.mrb[0].mxu0 %v79
  %v129 = vpop.f32.mrb[0].mxu0
  %v130 = vadd.f32 0.0, %v129
  %v131 = vpop.f32.mrb[0].mxu0
  %v132 = vpop.f32.mrb[0].mxu0
  %v133 = vadd.f32 0.0, %v132
  %v134 = vpop.f32.mrb[0].mxu0
  %135 = vmatprep.mubr.bf16.mxu0 0
  %136 = vmatmul.mubr.bf16.gmra.mrb[0].mxu0 %v82
  %v137 = vpop.f32.mrb[0].mxu0
  %v138 = vadd.f32 0.0, %v137
  %v139 = vpop.f32.mrb[0].mxu0
  %v140 = vpop.f32.mrb[0].mxu0
  %v141 = vadd.f32 0.0, %v140
  %v142 = vpop.f32.mrb[0].mxu0
  %143 = vmatprep.mubr.bf16.mxu0 0
  %144 = vmatmul.mubr.bf16.gmra.mrb[0].mxu0 %v85
  %v145 = vpop.f32.mrb[0].mxu0
  %v146 = vadd.f32 0.0, %v145
  %v147 = vpop.f32.mrb[0].mxu0
  %v148 = vpop.f32.mrb[0].mxu0
  %v149 = vadd.f32 0.0, %v148
  %v150 = vpop.f32.mrb[0].mxu0
  %151 = vdwg.mxu0
  %v152 = vpack.c.bf16 %v125, %v122
  %v153 = vpack.c.bf16 %v141, %v138
  %v154 = vpack.c.bf16 %v133, %v130
  %v155 = vpack.c.bf16 %v149, %v146
  %v156 = vld [vmem:[%s3] sm:$0xf]
  %v157 = vld [vmem:[%s3 + $0x4] sm:$0xf]
  %v158 = vld [vmem:[%s3 + $0x8] sm:$0xf]
  %v159 = vld [vmem:[%s3 + $0xc] sm:$0xf]
  %v160 = vld [vmem:[%s3 + $0x10] sm:$0xf]
  %v161 = vld [vmem:[%s3 + $0x14] sm:$0xf]
  %v162 = vld [vmem:[%s3 + $0x18] sm:$0xf]
  %v163 = vld [vmem:[%s3 + $0x1c] sm:$0xf]
  %v164 = vld [vmem:[%s3 + $0x20] sm:$0xf]
  %v165 = vld [vmem:[%s3 + $0x24] sm:$0xf]
  %v166 = vld [vmem:[%s3 + $0x28] sm:$0xf]
  %v167 = vld [vmem:[%s3 + $0x2c] sm:$0xf]
  %v168 = vld [vmem:[%s3 + $0x30] sm:$0xf]
  %v169 = vld [vmem:[%s3 + $0x34] sm:$0xf]
  %v170 = vld [vmem:[%s3 + $0x38] sm:$0xf]
  %v171 = vld [vmem:[%s3 + $0x3c] sm:$0xf]
  %v172 = vld [vmem:[%s3 + $0x40] sm:$0xf]
  %v173 = vld [vmem:[%s3 + $0x44] sm:$0xf]
  %v174 = vld [vmem:[%s3 + $0x48] sm:$0xf]
  %v175 = vld [vmem:[%s3 + $0x4c] sm:$0xf]
  %v176 = vld [vmem:[%s3 + $0x50] sm:$0xf]
  %v177 = vld [vmem:[%s3 + $0x54] sm:$0xf]
  %v178 = vld [vmem:[%s3 + $0x58] sm:$0xf]
  %v179 = vld [vmem:[%s3 + $0x5c] sm:$0xf]
  %v180 = vld [vmem:[%s3 + $0x60] sm:$0xf]
  %v181 = vld [vmem:[%s3 + $0x64] sm:$0xf]
  %v182 = vld [vmem:[%s3 + $0x68] sm:$0xf]
  %v183 = vld [vmem:[%s3 + $0x6c] sm:$0xf]
  %v184 = vld [vmem:[%s3 + $0x70] sm:$0xf]
  %v185 = vld [vmem:[%s3 + $0x74] sm:$0xf]
  %v186 = vld [vmem:[%s3 + $0x78] sm:$0xf]
  %v187 = vld [vmem:[%s3 + $0x7c] sm:$0xf]
  %v188 = vld [vmem:[%s4] sm:$0x1]
  %v190 = vlaneseq
  %v191 = vshrl.u32 %v190, 7
  %v192 = vsub.s32 0, %v191
  %v193 = vrot.slane %v188, %v192
  %v227 = vunpack.c.l.b16 %v156
  %v228 = vunpack.c.l.b16 %v157
  %v229 = vunpack.c.l.b16 %v158
  %v230 = vunpack.c.l.b16 %v159
  %v231 = vunpack.c.l.b16 %v160
  %v232 = vunpack.c.l.b16 %v161
  %v233 = vunpack.c.l.b16 %v162
  %v234 = vunpack.c.l.b16 %v163
  %v235 = vunpack.c.l.b16 %v164
  %v236 = vunpack.c.l.b16 %v165
  %v237 = vunpack.c.l.b16 %v166
  %v238 = vunpack.c.l.b16 %v167
  %v239 = vunpack.c.l.b16 %v168
  %v240 = vunpack.c.l.b16 %v169
  %v241 = vunpack.c.l.b16 %v170
  %v242 = vunpack.c.l.b16 %v171
  %v243 = vunpack.c.l.b16 %v172
  %v244 = vunpack.c.l.b16 %v173
  %v245 = vunpack.c.l.b16 %v174
  %v246 = vunpack.c.l.b16 %v175
  %v247 = vunpack.c.l.b16 %v176
  %v248 = vunpack.c.l.b16 %v177
  %v249 = vunpack.c.l.b16 %v178
  %v250 = vunpack.c.l.b16 %v179
  %v251 = vunpack.c.l.b16 %v180
  %v252 = vunpack.c.l.b16 %v181
  %v253 = vunpack.c.l.b16 %v182
  %v254 = vunpack.c.l.b16 %v183
  %v255 = vunpack.c.l.b16 %v184
  %v256 = vunpack.c.l.b16 %v185
  %v257 = vunpack.c.l.b16 %v186
  %v258 = vunpack.c.l.b16 %v187
  %v259 = vpack.c.b16 %v228, %v227
  %v260 = vpack.c.b16 %v230, %v229
  %v261 = vpack.c.b16 %v232, %v231
  %v262 = vpack.c.b16 %v234, %v233
  %v263 = vpack.c.b16 %v236, %v235
  %v264 = vpack.c.b16 %v238, %v237
  %v265 = vpack.c.b16 %v240, %v239
  %v266 = vpack.c.b16 %v242, %v241
  %v267 = vpack.c.b16 %v244, %v243
  %v268 = vpack.c.b16 %v246, %v245
  %v269 = vpack.c.b16 %v248, %v247
  %v270 = vpack.c.b16 %v250, %v249
  %v271 = vpack.c.b16 %v252, %v251
  %v272 = vpack.c.b16 %v254, %v253
  %v273 = vpack.c.b16 %v256, %v255
  %v274 = vpack.c.b16 %v258, %v257
  %291 = vmatprep.subr.bf16.mxu0 0
  %292 = vmatpush1.bf16.msra.mxu0 %v259
  %293 = vmatprep.subr.bf16.mxu0 0
  %294 = vmatpush1.bf16.msra.mxu0 %v260
  %295 = vmatprep.subr.bf16.mxu0 0
  %296 = vmatpush1.bf16.msra.mxu0 %v261
  %297 = vmatprep.subr.bf16.mxu0 0
  %298 = vmatpush1.bf16.msra.mxu0 %v262
  %299 = vmatprep.subr.bf16.mxu0 0
  %300 = vmatpush1.bf16.msra.mxu0 %v263
  %301 = vmatprep.subr.bf16.mxu0 0
  %302 = vmatpush1.bf16.msra.mxu0 %v264
  %303 = vmatprep.subr.bf16.mxu0 0
  %304 = vmatpush1.bf16.msra.mxu0 %v265
  %305 = vmatprep.subr.bf16.mxu0 0
  %306 = vmatpush1.bf16.msra.mxu0 %v266
  %307 = vmatprep.subr.bf16.mxu0 0
  %308 = vmatpush1.bf16.msra.mxu0 %v267
  %309 = vmatprep.subr.bf16.mxu0 0
  %310 = vmatpush1.bf16.msra.mxu0 %v268
  %311 = vmatprep.subr.bf16.mxu0 0
  %312 = vmatpush1.bf16.msra.mxu0 %v269
  %313 = vmatprep.subr.bf16.mxu0 0
  %314 = vmatpush1.bf16.msra.mxu0 %v270
  %315 = vmatprep.subr.bf16.mxu0 0
  %316 = vmatpush1.bf16.msra.mxu0 %v271
  %317 = vmatprep.subr.bf16.mxu0 0
  %318 = vmatpush1.bf16.msra.mxu0 %v272
  %319 = vmatprep.subr.bf16.mxu0 0
  %320 = vmatpush1.bf16.msra.mxu0 %v273
  %321 = vmatprep.subr.bf16.mxu0 0
  %322 = vmatpush1.bf16.msra.mxu0 %v274
  %323 = vmatprep.mubr.bf16.mxu0 %v153
  %324 = vmatmul.mubr.bf16.gmra.mrb[0].mxu0 %v152
  %v325 = vpop.f32.mrb[0].mxu0
  %v326 = vadd.f32 %v193, %v325
  %v327 = vpop.f32.mrb[0].mxu0
  %v328 = vpop.f32.mrb[0].mxu0
  %v329 = vadd.f32 %v193, %v328
  %v330 = vpop.f32.mrb[0].mxu0
  %331 = vmatprep.mubr.bf16.mxu0 %v155
  %332 = vmatmul.mubr.bf16.gmra.mrb[0].mxu0 %v154
  %v333 = vpop.f32.mrb[0].mxu0
  %v334 = vadd.f32 %v193, %v333
  %v335 = vpop.f32.mrb[0].mxu0
  %v336 = vpop.f32.mrb[0].mxu0
  %v337 = vadd.f32 %v193, %v336
  %v338 = vpop.f32.mrb[0].mxu0
  %339 = vdwg.mxu0
  %v340 = vmax.f32 %v326, 0.0
  %v341 = vmax.f32 %v329, 0.0
  %v342 = vmax.f32 %v334, 0.0
  %v343 = vmax.f32 %v337, 0.0
  %v344 = vpack.c.bf16 %v341, %v340
  %v345 = vpack.c.bf16 %v343, %v342
  %v346 = vld [vmem:[%s5] sm:$0xf]
  %v347 = vld [vmem:[%s5 + $0x4] sm:$0xf]
  %v348 = vld [vmem:[%s5 + $0x8] sm:$0xf]
  %v349 = vld [vmem:[%s5 + $0xc] sm:$0xf]
  %v354 = vunpack.c.l.b16 %v346
  %v355 = vunpack.c.l.b16 %v347
  %v356 = vunpack.c.l.b16 %v348
  %v357 = vunpack.c.l.b16 %v349
  %v358 = vpack.c.b16 %v355, %v354
  %v359 = vpack.c.b16 %v357, %v356
  %v363 = vsel %vm74, %v344, 0
  %v366 = vsel %vm74, %v345, 0
  %368 = vmatprep.subr.bf16.mxu0 0
  %369 = vmatpush1.bf16.msra.mxu0 %v358
  %370 = vmatprep.subr.bf16.mxu0 0
  %371 = vmatpush1.bf16.msra.mxu0 %v359
  %372 = vmatprep.subr.bf16.mxu0 0
  %373 = vmatpush1.bf16.msra.mxu0 0
  %374 = vmatprep.subr.bf16.mxu0 0
  %375 = vmatpush1.bf16.msra.mxu0 0
  %376 = vmatprep.subr.bf16.mxu0 0
  %377 = vmatpush1.bf16.msra.mxu0 0
  %378 = vmatprep.subr.bf16.mxu0 0
  %379 = vmatpush1.bf16.msra.mxu0 0
  %380 = vmatprep.subr.bf16.mxu0 0
  %381 = vmatpush1.bf16.msra.mxu0 0
  %382 = vmatprep.subr.bf16.mxu0 0
  %383 = vmatpush1.bf16.msra.mxu0 0
  %384 = vmatprep.subr.bf16.mxu0 0
  %385 = vmatpush1.bf16.msra.mxu0 0
  %386 = vmatprep.subr.bf16.mxu0 0
  %387 = vmatpush1.bf16.msra.mxu0 0
  %388 = vmatprep.subr.bf16.mxu0 0
  %389 = vmatpush1.bf16.msra.mxu0 0
  %390 = vmatprep.subr.bf16.mxu0 0
  %391 = vmatpush1.bf16.msra.mxu0 0
  %392 = vmatprep.subr.bf16.mxu0 0
  %393 = vmatpush1.bf16.msra.mxu0 0
  %394 = vmatprep.subr.bf16.mxu0 0
  %395 = vmatpush1.bf16.msra.mxu0 0
  %396 = vmatprep.subr.bf16.mxu0 0
  %397 = vmatpush1.bf16.msra.mxu0 0
  %398 = vmatprep.subr.bf16.mxu0 0
  %399 = vmatpush1.bf16.msra.mxu0 0
  %400 = vmatprep.mubr.bf16.mxu0 0
  %401 = vmatmul.mubr.bf16.gmra.mrb[0].mxu0 %v363
  %v402 = vpop.f32.mrb[0].mxu0
  %v403 = vadd.f32 0.0, %v402
  %v404 = vpop.f32.mrb[0].mxu0
  %v405 = vpop.f32.mrb[0].mxu0
  %v406 = vadd.f32 0.0, %v405
  %v407 = vpop.f32.mrb[0].mxu0
  %408 = vmatprep.mubr.bf16.mxu0 0
  %409 = vmatmul.mubr.bf16.gmra.mrb[0].mxu0 %v366
  %v410 = vpop.f32.mrb[0].mxu0
  %v411 = vadd.f32 0.0, %v410
  %v412 = vpop.f32.mrb[0].mxu0
  %v413 = vpop.f32.mrb[0].mxu0
  %v414 = vadd.f32 0.0, %v413
  %v415 = vpop.f32.mrb[0].mxu0
  %416 = vdwg.mxu0
  %v417 = vld [vmem:[%s6] sm:$0xf]
  %v418 = vld [vmem:[%s6 + $0x4] sm:$0xf]
  %v419 = vld [vmem:[%s6 + $0x8] sm:$0xf]
  %v420 = vld [vmem:[%s6 + $0xc] sm:$0xf]
  %v425 = vunpack.c.l.b16 %v417
  %v426 = vunpack.c.l.b16 %v418
  %v427 = vunpack.c.l.b16 %v419
  %v428 = vunpack.c.l.b16 %v420
  %v429 = vpack.c.b16 %v426, %v425
  %v430 = vpack.c.b16 %v428, %v427
  %433 = vmatprep.subr.bf16.mxu0 0
  %434 = vmatpush1.bf16.msra.mxu0 %v429
  %435 = vmatprep.subr.bf16.mxu0 0
  %436 = vmatpush1.bf16.msra.mxu0 %v430
  %437 = vmatprep.subr.bf16.mxu0 0
  %438 = vmatpush1.bf16.msra.mxu0 0
  %439 = vmatprep.subr.bf16.mxu0 0
  %440 = vmatpush1.bf16.msra.mxu0 0
  %441 = vmatprep.subr.bf16.mxu0 0
  %442 = vmatpush1.bf16.msra.mxu0 0
  %443 = vmatprep.subr.bf16.mxu0 0
  %444 = vmatpush1.bf16.msra.mxu0 0
  %445 = vmatprep.subr.bf16.mxu0 0
  %446 = vmatpush1.bf16.msra.mxu0 0
  %447 = vmatprep.subr.bf16.mxu0 0
  %448 = vmatpush1.bf16.msra.mxu0 0
  %449 = vmatprep.subr.bf16.mxu0 0
  %450 = vmatpush1.bf16.msra.mxu0 0
  %451 = vmatprep.subr.bf16.mxu0 0
  %452 = vmatpush1.bf16.msra.mxu0 0
  %453 = vmatprep.subr.bf16.mxu0 0
  %454 = vmatpush1.bf16.msra.mxu0 0
  %455 = vmatprep.subr.bf16.mxu0 0
  %456 = vmatpush1.bf16.msra.mxu0 0
  %457 = vmatprep.subr.bf16.mxu0 0
  %458 = vmatpush1.bf16.msra.mxu0 0
  %459 = vmatprep.subr.bf16.mxu0 0
  %460 = vmatpush1.bf16.msra.mxu0 0
  %461 = vmatprep.subr.bf16.mxu0 0
  %462 = vmatpush1.bf16.msra.mxu0 0
  %463 = vmatprep.subr.bf16.mxu0 0
  %464 = vmatpush1.bf16.msra.mxu0 0
  %465 = vmatprep.mubr.bf16.mxu0 0
  %466 = vmatmul.mubr.bf16.gmra.mrb[0].mxu0 %v363
  %v467 = vpop.f32.mrb[0].mxu0
  %v468 = vadd.f32 0.0, %v467
  %v469 = vpop.f32.mrb[0].mxu0
  %v470 = vpop.f32.mrb[0].mxu0
  %v471 = vadd.f32 0.0, %v470
  %v472 = vpop.f32.mrb[0].mxu0
  %473 = vmatprep.mubr.bf16.mxu0 0
  %474 = vmatmul.mubr.bf16.gmra.mrb[0].mxu0 %v366
  %v475 = vpop.f32.mrb[0].mxu0
  %v476 = vadd.f32 0.0, %v475
  %v477 = vpop.f32.mrb[0].mxu0
  %v478 = vpop.f32.mrb[0].mxu0
  %v479 = vadd.f32 0.0, %v478
  %v480 = vpop.f32.mrb[0].mxu0
  %481 = vdwg.mxu0
  %v482 = vpack.c.bf16 %v406, %v403
  %v483 = vpack.c.bf16 %v414, %v411
  %v484 = vpack.c.bf16 %v471, %v468
  %v485 = vpack.c.bf16 %v479, %v476
  %v486 = vld [vmem:[%s1] sm:$0xf]
  %v487 = vld [vmem:[%s1 + $0x4] sm:$0xf]
  %v488 = vld [vmem:[%s1 + $0x8] sm:$0xf]
  %v489 = vld [vmem:[%s1 + $0xc] sm:$0xf]
  %v490 = vld [vmem:[%s7] sm:$0x1]
  %v492 = vlaneseq
  %v493 = vshrl.u32 %v492, 7
  %v494 = vsub.s32 0, %v493
  %v495 = vrot.slane %v490, %v494
  %v501 = vunpack.c.l.b16 %v486
  %v502 = vunpack.c.l.b16 %v487
  %v503 = vunpack.c.l.b16 %v488
  %v504 = vunpack.c.l.b16 %v489
  %v505 = vpack.c.b16 %v502, %v501
  %v506 = vpack.c.b16 %v504, %v503
  %vm507 = vcmask 523264
  %v509 = vsel %vm507, %v505, 0
  %v512 = vsel %vm507, %v506, 0
  %514 = vmatprep.subr.bf16.mxu0 0
  %515 = vmatpush1.bf16.msra.mxu0 %v482
  %516 = vmatprep.subr.bf16.mxu0 0
  %517 = vmatpush1.bf16.msra.mxu0 %v483
  %518 = vmatprep.subr.bf16.mxu0 0
  %519 = vmatpush1.bf16.msra.mxu0 %v484
  %520 = vmatprep.subr.bf16.mxu0 0
  %521 = vmatpush1.bf16.msra.mxu0 %v485
  %522 = vmatprep.subr.bf16.mxu0 0
  %523 = vmatpush1.bf16.msra.mxu0 0
  %524 = vmatprep.subr.bf16.mxu0 0
  %525 = vmatpush1.bf16.msra.mxu0 0
  %526 = vmatprep.subr.bf16.mxu0 0
  %527 = vmatpush1.bf16.msra.mxu0 0
  %528 = vmatprep.subr.bf16.mxu0 0
  %529 = vmatpush1.bf16.msra.mxu0 0
  %530 = vmatprep.subr.bf16.mxu0 0
  %531 = vmatpush1.bf16.msra.mxu0 0
  %532 = vmatprep.subr.bf16.mxu0 0
  %533 = vmatpush1.bf16.msra.mxu0 0
  %534 = vmatprep.subr.bf16.mxu0 0
  %535 = vmatpush1.bf16.msra.mxu0 0
  %536 = vmatprep.subr.bf16.mxu0 0
  %537 = vmatpush1.bf16.msra.mxu0 0
  %538 = vmatprep.subr.bf16.mxu0 0
  %539 = vmatpush1.bf16.msra.mxu0 0
  %540 = vmatprep.subr.bf16.mxu0 0
  %541 = vmatpush1.bf16.msra.mxu0 0
  %542 = vmatprep.subr.bf16.mxu0 0
  %543 = vmatpush1.bf16.msra.mxu0 0
  %544 = vmatprep.subr.bf16.mxu0 0
  %545 = vmatpush1.bf16.msra.mxu0 0
  %546 = vmatprep.mubr.bf16.mxu0 0
  %547 = vmatmul.mubr.bf16.gmra.mrb[0].mxu0 %v509
  %v548 = vpop.f32.mrb[0].mxu0
  %v549 = vadd.f32 %v495, %v548
  %v550 = vpop.f32.mrb[0].mxu0
  %v551 = vpop.f32.mrb[0].mxu0
  %v552 = vadd.f32 %v495, %v551
  %v553 = vpop.f32.mrb[0].mxu0
  %554 = vmatprep.mubr.bf16.mxu0 0
  %555 = vmatmul.mubr.bf16.gmra.mrb[0].mxu0 %v512
  %v556 = vpop.f32.mrb[0].mxu0
  %v557 = vadd.f32 %v495, %v556
  %v558 = vpop.f32.mrb[0].mxu0
  %v559 = vpop.f32.mrb[0].mxu0
  %v560 = vadd.f32 %v495, %v559
  %v561 = vpop.f32.mrb[0].mxu0
  %562 = vdwg.mxu0
  %vm563 = vcmask 64512
  %v564 = vsel %vm563, %v549, -inf
  %565 = vmax.xlane.f32.xlu0 %v564
  %v566 = vpop.xlane.xlu0 %565
  %v567 = vsel %vm563, %v552, -inf
  %568 = vmax.xlane.f32.xlu0 %v567
  %v569 = vpop.xlane.xlu0 %568
  %v570 = vsel %vm563, %v557, -inf
  %571 = vmax.xlane.f32.xlu0 %v570
  %v572 = vpop.xlane.xlu0 %571
  %v573 = vsel %vm563, %v560, -inf
  %574 = vmax.xlane.f32.xlu0 %v573
  %v575 = vpop.xlane.xlu0 %574
  %v576 = vsub.f32 %v549, %v566
  %v577 = vsub.f32 %v552, %v569
  %v578 = vsub.f32 %v557, %v572
  %v579 = vsub.f32 %v560, %v575
  %v580 = vmul.f32 %v576, 1.442695
  %v581 = vpow.pop %v580
  %v582 = vmul.f32 %v577, 1.442695
  %v583 = vpow.pop %v582
  %v584 = vmul.f32 %v578, 1.442695
  %v585 = vpow.pop %v584
  %v586 = vmul.f32 %v579, 1.442695
  %v587 = vpow.pop %v586
  %v588 = vsel %vm563, %v581, 0.0
  %589 = vadd.xlane.f32.xlu0 %v588
  %v590 = vpop.xlane.xlu0 %589
  %v591 = vsel %vm563, %v583, 0.0
  %592 = vadd.xlane.f32.xlu0 %v591
  %v593 = vpop.xlane.xlu0 %592
  %v594 = vsel %vm563, %v585, 0.0
  %595 = vadd.xlane.f32.xlu0 %v594
  %v596 = vpop.xlane.xlu0 %595
  %v597 = vsel %vm563, %v587, 0.0
  %598 = vadd.xlane.f32.xlu0 %v597
  %v599 = vpop.xlane.xlu0 %598
  %v600 = vlog2.pop %v590
  %v601 = vmul.f32 %v600, 0.6931472
  %v602 = vlog2.pop %v593
  %v603 = vmul.f32 %v602, 0.6931472
  %v604 = vlog2.pop %v596
  %v605 = vmul.f32 %v604, 0.6931472
  %v606 = vlog2.pop %v599
  %v607 = vmul.f32 %v606, 0.6931472
  %v608 = vsub.f32 %v576, %v601
  %v609 = vsub.f32 %v577, %v603
  %v610 = vsub.f32 %v578, %v605
  %v611 = vsub.f32 %v579, %v607
  %612 = vst.msk [vmem:[%s8] sm:$0xff] %vm563, %v608
  %613 = vst.msk [vmem:[%s8 + $0x8] sm:$0xff] %vm563, %v609
  %614 = vst.msk [vmem:[%s8 + $0x10] sm:$0xff] %vm563, %v610
  %615 = vst.msk [vmem:[%s8 + $0x18] sm:$0xff] %vm563, %v611
  // Predicated region
  $region34: #{tpu_custom_call.1} parent=0 // pred_check
    _
  $region35: #{tpu_custom_call.1} parent=0 // pred_check_branch
    %617 = sbr.rel (0) target = $region37
  $region36: #{tpu_custom_call.1} parent=0 // pred_region
    _
  $region37: #{tpu_custom_call.1} parent=0 // pred_fallthru
    _
  // Predicated region
  $region38: #{tpu_custom_call.1} parent=0 // pred_check
    _
  $region39: #{tpu_custom_call.1} parent=0 // pred_check_branch
    %619 = sbr.rel (0) target = $region41
  $region40: #{tpu_custom_call.1} parent=0 // pred_region
    _
  $region41: #{tpu_custom_call.1} parent=0 // pred_fallthru
    _

</llo_original>
